<compile_context>
chip_gen: v7x
topology: tpu7x:2x2x1
jax: 0.10.0
libtpu: 0.0.40
codegen_flags: <defaults>
</compile_context>

<pallas_src>
import functools

import jax
import jax.numpy as jnp
from jax.experimental import pallas as pl
from jax.experimental.pallas import tpu as pltpu


def _round_up(x, m):
    return (x + m - 1) // m * m


def _vmem_budget_bytes():
    """Per-core VMEM budget with headroom for compiler internal scratch."""
    cap = 64 * 1024 * 1024          # conservative default = v7x per-TC VMEM
    try:
        info = pltpu.get_tpu_info()
        cap = int(getattr(info, "vmem_capacity_bytes", cap))
    except Exception:
        pass
    return max(cap - 16 * 1024 * 1024, 16 * 1024 * 1024)


# ------------------------------- kernels ------------------------------------

def _ffn_resident_kernel(x_ref, w1_ref, b1_ref, w2_ref, b2_ref, o_ref):
    # Whole FFN for one row tile. W1/W2/b1/b2 have constant index_maps, so they
    # are DMA'd from HBM exactly once and stay VMEM-resident; no accumulator.
    h = jnp.dot(x_ref[...], w1_ref[...], preferred_element_type=jnp.float32)
    h = jnp.maximum(h + b1_ref[...], 0.0)
    # h cast to bf16 before the second MXU matmul (f32 accumulation) — this is
    # the reason the test tolerance vs the f32 reference is 5e-2.
    y = jnp.dot(h.astype(w2_ref.dtype), w2_ref[...],
                preferred_element_type=jnp.float32)
    o_ref[...] = (y + b2_ref[...]).astype(o_ref.dtype)


def _ffn_streamed_kernel(x_ref, w1_ref, b1_ref, w2_ref, b2_ref, o_ref, acc_ref):
    # Fallback when the full weights do not fit VMEM: F is the trailing
    # ("arbitrary") reduction axis; partial Linear2 products accumulate in f32.
    f = pl.program_id(1)

    @pl.when(f == 0)
    def _():
        acc_ref[...] = jnp.zeros_like(acc_ref)

    h = jnp.dot(x_ref[...], w1_ref[...], preferred_element_type=jnp.float32)
    h = jnp.maximum(h + b1_ref[...], 0.0)
    acc_ref[...] += jnp.dot(h.astype(w2_ref.dtype), w2_ref[...],
                            preferred_element_type=jnp.float32)

    @pl.when(f == pl.num_programs(1) - 1)
    def _():
        o_ref[...] = (acc_ref[...] + b2_ref[...]).astype(o_ref.dtype)


# ------------------------------- wrapper ------------------------------------

@functools.partial(jax.jit, static_argnames=("tile_m", "compute_dtype"))
def position_wise_feed_forward(x, w1, b1, w2, b2, *, tile_m=256,
                               compute_dtype=jnp.bfloat16):
    """x: (B, S, D); w1: (D, F); b1: (F,); w2: (F, D); b2: (D,).

    Weights stored as (in_features, out_features) = transpose of PyTorch layout.
    """
    B, S, D = x.shape
    F = w1.shape[1]
    out_dtype = x.dtype
    M = B * S

    item = jnp.dtype(compute_dtype).itemsize
    out_item = jnp.dtype(out_dtype).itemsize

    # Lane-friendly padded dims (only materialized if actually unaligned).
    Dp = _round_up(D, 128)
    Fp = _round_up(F, 128)

    # Row-tile: multiple of 8 sublanes, never wildly larger than M itself.
    tile_m = max(8, _round_up(min(int(tile_m), _round_up(M, 8)), 8))
    grid_m = pl.cdiv(M, tile_m)   # ragged M handled by Pallas boundary masking

    # ---- operand prep: skip padding copies when already 128-aligned. --------
    x2 = x.reshape(M, D).astype(compute_dtype)
    if Dp != D:
        x2 = jnp.pad(x2, ((0, 0), (0, Dp - D)))
    w1p = w1.astype(compute_dtype)
    w2p = w2.astype(compute_dtype)
    if Dp != D or Fp != F:
        w1p = jnp.pad(w1p, ((0, Dp - D), (0, Fp - F)))
        w2p = jnp.pad(w2p, ((0, Fp - F), (0, Dp - D)))
    b1p = b1.astype(jnp.float32)
    if Fp != F:
        b1p = jnp.pad(b1p, (0, Fp - F))
    b1p = b1p.reshape(1, Fp)
    b2p = b2.astype(jnp.float32)
    if Dp != D:
        b2p = jnp.pad(b2p, (0, Dp - D))
    b2p = b2p.reshape(1, Dp)

    budget = _vmem_budget_bytes()

    # Conservative footprints: 2 buffers for every streamed/blocked operand,
    # plus the f32 hidden tile the compiler keeps live between the two dots.
    def _resident_footprint():
        w_bytes = 2 * (Dp * Fp + Fp * Dp) * item
        io_bytes = 2 * tile_m * Dp * item + 2 * tile_m * Dp * out_item
        bias_bytes = 2 * (Fp + Dp) * 4
        h_bytes = tile_m * Fp * 4
        return w_bytes + io_bytes + bias_bytes + h_bytes

    def _streamed_footprint(tf):
        w_bytes = 2 * (Dp * tf + tf * Dp) * item
        io_bytes = 2 * tile_m * Dp * item + 2 * tile_m * Dp * out_item
        bias_bytes = 2 * (tf + Dp) * 4
        acc_bytes = tile_m * Dp * 4
        h_bytes = tile_m * tf * 4
        return w_bytes + io_bytes + bias_bytes + acc_bytes + h_bytes

    use_resident = int(_resident_footprint() * 1.25) <= budget
    flops = 4 * grid_m * tile_m * Dp * Fp   # two matmuls per row tile

    if use_resident:
        vmem_limit = int(min(max(int(_resident_footprint() * 1.25),
                                 16 * 1024 * 1024), budget))
        bytes_accessed = int(x2.size * item + w1p.size * item + w2p.size * item
                             + b1p.size * 4 + b2p.size * 4 + M * Dp * out_item)
        out = pl.pallas_call(
            _ffn_resident_kernel,
            out_shape=jax.ShapeDtypeStruct((M, Dp), out_dtype),
            grid_spec=pltpu.PrefetchScalarGridSpec(
                num_scalar_prefetch=0,
                grid=(grid_m,),
                in_specs=[
                    pl.BlockSpec((tile_m, Dp), lambda i: (i, 0)),  # x row tile
                    pl.BlockSpec((Dp, Fp), lambda i: (0, 0)),      # W1 (resident)
                    pl.BlockSpec((1, Fp), lambda i: (0, 0)),       # b1 (resident)
                    pl.BlockSpec((Fp, Dp), lambda i: (0, 0)),      # W2 (resident)
                    pl.BlockSpec((1, Dp), lambda i: (0, 0)),       # b2 (resident)
                ],
                out_specs=pl.BlockSpec((tile_m, Dp), lambda i: (i, 0)),
            ),
            compiler_params=pltpu.CompilerParams(
                dimension_semantics=("parallel",),
                vmem_limit_bytes=vmem_limit,
            ),
            cost_estimate=pl.CostEstimate(flops=flops, transcendentals=0,
                                          bytes_accessed=bytes_accessed),
        )(x2, w1p, b1p, w2p, b2p)
    else:
        # Largest 128-multiple divisor of Fp whose footprint fits the budget.
        tile_f = 128
        cand = Fp
        while cand >= 128:
            if Fp % cand == 0 and int(_streamed_footprint(cand) * 1.25) <= budget:
                tile_f = cand
                break
            cand -= 128
        vmem_limit = int(min(max(int(_streamed_footprint(tile_f) * 1.25),
                                 16 * 1024 * 1024), budget))
        # Under this grid the weights are re-streamed once per row tile.
        bytes_accessed = int(x2.size * item
                             + grid_m * (w1p.size * item + w2p.size * item
                                         + b1p.size * 4)
                             + b2p.size * 4 + M * Dp * out_item)
        out = pl.pallas_call(
            _ffn_streamed_kernel,
            out_shape=jax.ShapeDtypeStruct((M, Dp), out_dtype),
            grid_spec=pltpu.PrefetchScalarGridSpec(
                num_scalar_prefetch=0,
                grid=(grid_m, Fp // tile_f),         # F (reduction) axis last
                in_specs=[
                    pl.BlockSpec((tile_m, Dp), lambda i, f: (i, 0)),   # x rows
                    pl.BlockSpec((Dp, tile_f), lambda i, f: (0, f)),   # W1 slice
                    pl.BlockSpec((1, tile_f), lambda i, f: (0, f)),    # b1 slice
                    pl.BlockSpec((tile_f, Dp), lambda i, f: (f, 0)),   # W2 slice
                    pl.BlockSpec((1, Dp), lambda i, f: (0, 0)),        # b2
                ],
                out_specs=pl.BlockSpec((tile_m, Dp), lambda i, f: (i, 0)),
                scratch_shapes=[pltpu.VMEM((tile_m, Dp), jnp.float32)],
            ),
            compiler_params=pltpu.CompilerParams(
                dimension_semantics=("parallel", "arbitrary"),
                vmem_limit_bytes=vmem_limit,
            ),
            cost_estimate=pl.CostEstimate(flops=flops, transcendentals=0,
                                          bytes_accessed=bytes_accessed),
        )(x2, w1p, b1p, w2p, b2p)

    if Dp != D:
        out = out[:, :D]
    return out.reshape(B, S, D)


if __name__ == "__main__":
    # Small, deterministic example shapes consistent with the module:
    # batch=2, seq=8, input_dim=32, ff_dim=64.
    B, S, D, FF = 2, 8, 32, 64

    key = jax.random.PRNGKey(0)
    kx, kw1, kb1, kw2, kb2 = jax.random.split(key, 5)

    x = jax.random.normal(kx, (B, S, D), dtype=jnp.float32)
    # Deterministic parameter init; shapes match nn.Linear(D, FF) / nn.Linear(FF, D),
    # stored as (in, out) = transpose of PyTorch's (out, in) weight layout.
    w1 = jax.random.normal(kw1, (D, FF), dtype=jnp.float32) * (1.0 / jnp.sqrt(D))
    b1 = jax.random.normal(kb1, (FF,), dtype=jnp.float32) * 0.01
    w2 = jax.random.normal(kw2, (FF, D), dtype=jnp.float32) * (1.0 / jnp.sqrt(FF))
    b2 = jax.random.normal(kb2, (D,), dtype=jnp.float32) * 0.01

    y = position_wise_feed_forward(x, w1, b1, w2, b2)
    y = jax.block_until_ready(y)

    # Pure-JAX f32 reference (eval-mode dropout = identity).  Kernel runs the
    # matmuls in bf16 with f32 accumulation, so tolerance is loosened accordingly.
    y_ref = jnp.maximum(x @ w1 + b1, 0.0) @ w2 + b2
    assert y.shape == (B, S, D)
    assert jnp.allclose(y, y_ref, atol=5e-2, rtol=5e-2), float(jnp.max(jnp.abs(y - y_ref)))

    print("KERNEL_OK")
</pallas_src>

<mosaic_0001>
module attributes {stable_mosaic.version = 11 : i64} {
  func.func @_ffn_resident_kernel(%arg0: i32, %arg1: memref<16x128xbf16, #tpu.memory_space<vmem>>, %arg2: memref<128x128xbf16, #tpu.memory_space<vmem>>, %arg3: memref<1x128xf32, #tpu.memory_space<vmem>>, %arg4: memref<128x128xbf16, #tpu.memory_space<vmem>>, %arg5: memref<1x128xf32, #tpu.memory_space<vmem>>, %arg6: memref<16x128xf32, #tpu.memory_space<vmem>>) attributes {dimension_semantics = [#tpu.dimension_semantics<parallel>], iteration_bounds = array<i64: 1>, scalar_prefetch = 0 : i64, scratch_operands = 0 : i64, tpu.core_type = #tpu.core_type<tc>, window_params = [{transform_indices = @transform_0, window_bounds = array<i64: 16, 128>}, {pipeline_mode = #tpu.pipeline_mode<synchronous>, transform_indices = @transform_1, window_bounds = array<i64: 128, 128>}, {pipeline_mode = #tpu.pipeline_mode<synchronous>, transform_indices = @transform_2, window_bounds = array<i64: 1, 128>}, {pipeline_mode = #tpu.pipeline_mode<synchronous>, transform_indices = @transform_3, window_bounds = array<i64: 128, 128>}, {pipeline_mode = #tpu.pipeline_mode<synchronous>, transform_indices = @transform_4, window_bounds = array<i64: 1, 128>}, {transform_indices = @transform_5, window_bounds = array<i64: 16, 128>}]} {
    %c0 = arith.constant 0 : index
    %c0_0 = arith.constant 0 : index
    %0 = vector.load %arg1[%c0, %c0_0] : memref<16x128xbf16, #tpu.memory_space<vmem>>, vector<16x128xbf16>
    %c0_1 = arith.constant 0 : index
    %c0_2 = arith.constant 0 : index
    %1 = vector.load %arg2[%c0_1, %c0_2] : memref<128x128xbf16, #tpu.memory_space<vmem>>, vector<128x128xbf16>
    %cst = arith.constant dense<0.000000e+00> : vector<16x128xf32>
    %2 = tpu.matmul %0, %1, %cst {dimension_numbers = #tpu.dot_dimension_numbers<[1], [0], [0], [1], [0, 0, 1, 1], [], []>} : vector<16x128xbf16>, vector<128x128xbf16>, vector<16x128xf32> -> vector<16x128xf32>
    %c0_3 = arith.constant 0 : index
    %c0_4 = arith.constant 0 : index
    %3 = vector.load %arg3[%c0_3, %c0_4] : memref<1x128xf32, #tpu.memory_space<vmem>>, vector<1x128xf32>
    %4 = vector.broadcast %3 : vector<1x128xf32> to vector<16x128xf32>
    %5 = arith.addf %2, %4 : vector<16x128xf32>
    %cst_5 = arith.constant 0.000000e+00 : f32
    %6 = vector.broadcast %cst_5 : f32 to vector<16x128xf32>
    %7 = arith.maximumf %5, %6 : vector<16x128xf32>
    %8 = arith.truncf %7 : vector<16x128xf32> to vector<16x128xbf16>
    %c0_6 = arith.constant 0 : index
    %c0_7 = arith.constant 0 : index
    %9 = vector.load %arg4[%c0_6, %c0_7] : memref<128x128xbf16, #tpu.memory_space<vmem>>, vector<128x128xbf16>
    %cst_8 = arith.constant dense<0.000000e+00> : vector<16x128xf32>
    %10 = tpu.matmul %8, %9, %cst_8 {dimension_numbers = #tpu.dot_dimension_numbers<[1], [0], [0], [1], [0, 0, 1, 1], [], []>} : vector<16x128xbf16>, vector<128x128xbf16>, vector<16x128xf32> -> vector<16x128xf32>
    %c0_9 = arith.constant 0 : index
    %c0_10 = arith.constant 0 : index
    %11 = vector.load %arg5[%c0_9, %c0_10] : memref<1x128xf32, #tpu.memory_space<vmem>>, vector<1x128xf32>
    %12 = vector.broadcast %11 : vector<1x128xf32> to vector<16x128xf32>
    %13 = arith.addf %10, %12 : vector<16x128xf32>
    %c0_11 = arith.constant 0 : index
    %c0_12 = arith.constant 0 : index
    %14 = vector.load %arg6[%c0_11, %c0_12] : memref<16x128xf32, #tpu.memory_space<vmem>>, vector<16x128xf32>
    tpu.vector_store %arg6[%c0_11, %c0_12], %13 {strides = array<i32>} : memref<16x128xf32, #tpu.memory_space<vmem>>, vector<16x128xf32>,
    return
  }
  func.func @transform_0(%arg0: i32) -> (i32, i32) {
    %c0_i32 = arith.constant 0 : i32
    %c0_i32_0 = arith.constant 0 : i32
    return %arg0, %c0_i32 : i32, i32
  }
  func.func @transform_1(%arg0: i32) -> (i32, i32) {
    %c0_i32 = arith.constant 0 : i32
    %c0_i32_0 = arith.constant 0 : i32
    %c0_i32_1 = arith.constant 0 : i32
    return %c0_i32, %c0_i32_0 : i32, i32
  }
  func.func @transform_2(%arg0: i32) -> (i32, i32) {
    %c0_i32 = arith.constant 0 : i32
    %c0_i32_0 = arith.constant 0 : i32
    %c0_i32_1 = arith.constant 0 : i32
    return %c0_i32, %c0_i32_0 : i32, i32
  }
  func.func @transform_3(%arg0: i32) -> (i32, i32) {
    %c0_i32 = arith.constant 0 : i32
    %c0_i32_0 = arith.constant 0 : i32
    %c0_i32_1 = arith.constant 0 : i32
    return %c0_i32, %c0_i32_0 : i32, i32
  }
  func.func @transform_4(%arg0: i32) -> (i32, i32) {
    %c0_i32 = arith.constant 0 : i32
    %c0_i32_0 = arith.constant 0 : i32
    %c0_i32_1 = arith.constant 0 : i32
    return %c0_i32, %c0_i32_0 : i32, i32
  }
  func.func @transform_5(%arg0: i32) -> (i32, i32) {
    %c0_i32 = arith.constant 0 : i32
    %c0_i32_0 = arith.constant 0 : i32
    return %arg0, %c0_i32 : i32, i32
  }
}

</mosaic_0001>

<llo_original>
// kernel: position_wise_feed_forward.1
$region0: #{position_wise_feed_forward.1}
  #allocation0 [shape = 'u32[]', space=smem, size = 0x4, offset = 0x4, fixed_abs, tag = 'smem constant byte address 0x4 - core index']
  #allocation1 [shape = 'u32[144,128]{1,0:T(1,128)}', space=vmem, size = 0x12000, scoped, tag = 'internal scratch']
  %s0 = inlined_call_operand.vmem [shape: bf16[16,128], index: 0, kind: input, shape index: {}]
  %s1 = inlined_call_operand.vmem [shape: bf16[128,128], index: 1, kind: input, shape index: {}]
  %s2 = inlined_call_operand.vmem [shape: f32[1,128], index: 2, kind: input, shape index: {}]
  %s3 = inlined_call_operand.vmem [shape: bf16[128,128], index: 3, kind: input, shape index: {}]
  %s4 = inlined_call_operand.vmem [shape: f32[1,128], index: 4, kind: input, shape index: {}]
  %s5 = inlined_call_operand.vmem [shape: f32[16,128], index: 5, kind: output, shape index: {}]
  %s6 = sld [smem:[#allocation0]]
  $region30: #{position_wise_feed_forward.1} parent=0
    _
  %s8 = ssub.s32 1, %s6
  %s9 = scalar_select 0, %s8, %s6
  // Predicated region
  $region2: #{position_wise_feed_forward.1} parent=0 // pred_check
    _
  $region3: #{position_wise_feed_forward.1} parent=0 // pred_check_branch
    %11 = sbr.rel (0) target = $region5
  $region4: #{position_wise_feed_forward.1} parent=0 // pred_region
    _
  $region5: #{position_wise_feed_forward.1} parent=0 // pred_fallthru
    _
  // Predicated region
  $region6: #{position_wise_feed_forward.1} parent=0 // pred_check
    _
  $region7: #{position_wise_feed_forward.1} parent=0 // pred_check_branch
    %13 = sbr.rel (0) target = $region9
  $region8: #{position_wise_feed_forward.1} parent=0 // pred_region
    _
  $region9: #{position_wise_feed_forward.1} parent=0 // pred_fallthru
    _
  // Predicated region
  $region10: #{position_wise_feed_forward.1} parent=0 // pred_check
    _
  $region11: #{position_wise_feed_forward.1} parent=0 // pred_check_branch
    %15 = sbr.rel (0) target = $region13
  $region12: #{position_wise_feed_forward.1} parent=0 // pred_region
    _
  $region13: #{position_wise_feed_forward.1} parent=0 // pred_fallthru
    _
  // Predicated region
  $region14: #{position_wise_feed_forward.1} parent=0 // pred_check
    _
  $region15: #{position_wise_feed_forward.1} parent=0 // pred_check_branch
    %17 = sbr.rel (0) target = $region17
  $region16: #{position_wise_feed_forward.1} parent=0 // pred_region
    _
  $region17: #{position_wise_feed_forward.1} parent=0 // pred_fallthru
    _
  // Predicated region
  $region18: #{position_wise_feed_forward.1} parent=0 // pred_check
    _
  $region19: #{position_wise_feed_forward.1} parent=0 // pred_check_branch
    %19 = sbr.rel (0) target = $region21
  $region20: #{position_wise_feed_forward.1} parent=0 // pred_region
    _
  $region21: #{position_wise_feed_forward.1} parent=0 // pred_fallthru
    _
  %v21 = vld [vmem:[%s0] sm:$0xf]
  %v22 = vld [vmem:[%s0 + $0x4] sm:$0xf]
  %v23 = vld [vmem:[%s1] sm:$0xf]
  %v24 = vld [vmem:[%s1 + $0x4] sm:$0xf]
  %v25 = vld [vmem:[%s1 + $0x8] sm:$0xf]
  %v26 = vld [vmem:[%s1 + $0xc] sm:$0xf]
  %v27 = vld [vmem:[%s1 + $0x10] sm:$0xf]
  %v28 = vld [vmem:[%s1 + $0x14] sm:$0xf]
  %v29 = vld [vmem:[%s1 + $0x18] sm:$0xf]
  %v30 = vld [vmem:[%s1 + $0x1c] sm:$0xf]
  %v31 = vld [vmem:[%s1 + $0x20] sm:$0xf]
  %v32 = vld [vmem:[%s1 + $0x24] sm:$0xf]
  %v33 = vld [vmem:[%s1 + $0x28] sm:$0xf]
  %v34 = vld [vmem:[%s1 + $0x2c] sm:$0xf]
  %v35 = vld [vmem:[%s1 + $0x30] sm:$0xf]
  %v36 = vld [vmem:[%s1 + $0x34] sm:$0xf]
  %v37 = vld [vmem:[%s1 + $0x38] sm:$0xf]
  %v38 = vld [vmem:[%s1 + $0x3c] sm:$0xf]
  %v39 = vld [vmem:[%s2] sm:$0x1]
  %v41 = vlaneseq
  %v42 = vshrl.u32 %v41, 7
  %v43 = vsub.s32 0, %v42
  %v44 = vrot.slane %v39, %v43
  %v48 = vunpack.c.l.b16 %v21
  %v49 = vunpack.c.l.b16 %v22
  %v50 = vpack.c.b16 %v49, %v48
  %v68 = vunpack.c.l.b16 %v23
  %v69 = vunpack.c.l.b16 %v24
  %v70 = vunpack.c.l.b16 %v25
  %v71 = vunpack.c.l.b16 %v26
  %v72 = vunpack.c.l.b16 %v27
  %v73 = vunpack.c.l.b16 %v28
  %v74 = vunpack.c.l.b16 %v29
  %v75 = vunpack.c.l.b16 %v30
  %v76 = vunpack.c.l.b16 %v31
  %v77 = vunpack.c.l.b16 %v32
  %v78 = vunpack.c.l.b16 %v33
  %v79 = vunpack.c.l.b16 %v34
  %v80 = vunpack.c.l.b16 %v35
  %v81 = vunpack.c.l.b16 %v36
  %v82 = vunpack.c.l.b16 %v37
  %v83 = vunpack.c.l.b16 %v38
  %v84 = vpack.c.b16 %v69, %v68
  %v85 = vpack.c.b16 %v71, %v70
  %v86 = vpack.c.b16 %v73, %v72
  %v87 = vpack.c.b16 %v75, %v74
  %v88 = vpack.c.b16 %v77, %v76
  %v89 = vpack.c.b16 %v79, %v78
  %v90 = vpack.c.b16 %v81, %v80
  %v91 = vpack.c.b16 %v83, %v82
  %100 = vmatprep.subr.bf16.mxu0 0
  %101 = vmatpush1.bf16.msra.mxu0 %v84
  %102 = vmatprep.subr.bf16.mxu0 0
  %103 = vmatpush1.bf16.msra.mxu0 %v85
  %104 = vmatprep.subr.bf16.mxu0 0
  %105 = vmatpush1.bf16.msra.mxu0 %v86
  %106 = vmatprep.subr.bf16.mxu0 0
  %107 = vmatpush1.bf16.msra.mxu0 %v87
  %108 = vmatprep.subr.bf16.mxu0 0
  %109 = vmatpush1.bf16.msra.mxu0 %v88
  %110 = vmatprep.subr.bf16.mxu0 0
  %111 = vmatpush1.bf16.msra.mxu0 %v89
  %112 = vmatprep.subr.bf16.mxu0 0
  %113 = vmatpush1.bf16.msra.mxu0 %v90
  %114 = vmatprep.subr.bf16.mxu0 0
  %115 = vmatpush1.bf16.msra.mxu0 %v91
  %116 = vmatprep.subr.bf16.mxu0 0
  %117 = vmatpush1.bf16.msra.mxu0 0
  %118 = vmatprep.subr.bf16.mxu0 0
  %119 = vmatpush1.bf16.msra.mxu0 0
  %120 = vmatprep.subr.bf16.mxu0 0
  %121 = vmatpush1.bf16.msra.mxu0 0
  %122 = vmatprep.subr.bf16.mxu0 0
  %123 = vmatpush1.bf16.msra.mxu0 0
  %124 = vmatprep.subr.bf16.mxu0 0
  %125 = vmatpush1.bf16.msra.mxu0 0
  %126 = vmatprep.subr.bf16.mxu0 0
  %127 = vmatpush1.bf16.msra.mxu0 0
  %128 = vmatprep.subr.bf16.mxu0 0
  %129 = vmatpush1.bf16.msra.mxu0 0
  %130 = vmatprep.subr.bf16.mxu0 0
  %131 = vmatpush1.bf16.msra.mxu0 0
  %132 = vmatprep.mubr.bf16.mxu0 0
  %133 = vmatmul.mubr.bf16.gmra.mrb[0].mxu0 %v50
  %v134 = vpop.f32.mrb[0].mxu0
  %v135 = vadd.f32 %v44, %v134
  %v136 = vpop.f32.mrb[0].mxu0
  %v137 = vpop.f32.mrb[0].mxu0
  %v138 = vadd.f32 %v44, %v137
  %v139 = vpop.f32.mrb[0].mxu0
  %140 = vdwg.mxu0
  %v141 = vmax.f32 %v135, 0.0
  %v142 = vmax.f32 %v138, 0.0
  %v143 = vpack.c.bf16 %v142, %v141
  %v144 = vld [vmem:[%s3] sm:$0xf]
  %v145 = vld [vmem:[%s3 + $0x4] sm:$0xf]
  %v146 = vld [vmem:[%s3 + $0x8] sm:$0xf]
  %v147 = vld [vmem:[%s3 + $0xc] sm:$0xf]
  %v148 = vld [vmem:[%s3 + $0x10] sm:$0xf]
  %v149 = vld [vmem:[%s3 + $0x14] sm:$0xf]
  %v150 = vld [vmem:[%s3 + $0x18] sm:$0xf]
  %v151 = vld [vmem:[%s3 + $0x1c] sm:$0xf]
  %v152 = vld [vmem:[%s3 + $0x20] sm:$0xf]
  %v153 = vld [vmem:[%s3 + $0x24] sm:$0xf]
  %v154 = vld [vmem:[%s3 + $0x28] sm:$0xf]
  %v155 = vld [vmem:[%s3 + $0x2c] sm:$0xf]
  %v156 = vld [vmem:[%s3 + $0x30] sm:$0xf]
  %v157 = vld [vmem:[%s3 + $0x34] sm:$0xf]
  %v158 = vld [vmem:[%s3 + $0x38] sm:$0xf]
  %v159 = vld [vmem:[%s3 + $0x3c] sm:$0xf]
  %v160 = vld [vmem:[%s4] sm:$0x1]
  %v162 = vlaneseq
  %v163 = vshrl.u32 %v162, 7
  %v164 = vsub.s32 0, %v163
  %v165 = vrot.slane %v160, %v164
  %v183 = vunpack.c.l.b16 %v144
  %v184 = vunpack.c.l.b16 %v145
  %v185 = vunpack.c.l.b16 %v146
  %v186 = vunpack.c.l.b16 %v147
  %v187 = vunpack.c.l.b16 %v148
  %v188 = vunpack.c.l.b16 %v149
  %v189 = vunpack.c.l.b16 %v150
  %v190 = vunpack.c.l.b16 %v151
  %v191 = vunpack.c.l.b16 %v152
  %v192 = vunpack.c.l.b16 %v153
  %v193 = vunpack.c.l.b16 %v154
  %v194 = vunpack.c.l.b16 %v155
  %v195 = vunpack.c.l.b16 %v156
  %v196 = vunpack.c.l.b16 %v157
  %v197 = vunpack.c.l.b16 %v158
  %v198 = vunpack.c.l.b16 %v159
  %v199 = vpack.c.b16 %v184, %v183
  %v200 = vpack.c.b16 %v186, %v185
  %v201 = vpack.c.b16 %v188, %v187
  %v202 = vpack.c.b16 %v190, %v189
  %v203 = vpack.c.b16 %v192, %v191
  %v204 = vpack.c.b16 %v194, %v193
  %v205 = vpack.c.b16 %v196, %v195
  %v206 = vpack.c.b16 %v198, %v197
  %215 = vmatprep.subr.bf16.mxu0 0
  %216 = vmatpush1.bf16.msra.mxu0 %v199
  %217 = vmatprep.subr.bf16.mxu0 0
  %218 = vmatpush1.bf16.msra.mxu0 %v200
  %219 = vmatprep.subr.bf16.mxu0 0
  %220 = vmatpush1.bf16.msra.mxu0 %v201
  %221 = vmatprep.subr.bf16.mxu0 0
  %222 = vmatpush1.bf16.msra.mxu0 %v202
  %223 = vmatprep.subr.bf16.mxu0 0
  %224 = vmatpush1.bf16.msra.mxu0 %v203
  %225 = vmatprep.subr.bf16.mxu0 0
  %226 = vmatpush1.bf16.msra.mxu0 %v204
  %227 = vmatprep.subr.bf16.mxu0 0
  %228 = vmatpush1.bf16.msra.mxu0 %v205
  %229 = vmatprep.subr.bf16.mxu0 0
  %230 = vmatpush1.bf16.msra.mxu0 %v206
  %231 = vmatprep.subr.bf16.mxu0 0
  %232 = vmatpush1.bf16.msra.mxu0 0
  %233 = vmatprep.subr.bf16.mxu0 0
  %234 = vmatpush1.bf16.msra.mxu0 0
  %235 = vmatprep.subr.bf16.mxu0 0
  %236 = vmatpush1.bf16.msra.mxu0 0
  %237 = vmatprep.subr.bf16.mxu0 0
  %238 = vmatpush1.bf16.msra.mxu0 0
  %239 = vmatprep.subr.bf16.mxu0 0
  %240 = vmatpush1.bf16.msra.mxu0 0
  %241 = vmatprep.subr.bf16.mxu0 0
  %242 = vmatpush1.bf16.msra.mxu0 0
  %243 = vmatprep.subr.bf16.mxu0 0
  %244 = vmatpush1.bf16.msra.mxu0 0
  %245 = vmatprep.subr.bf16.mxu0 0
  %246 = vmatpush1.bf16.msra.mxu0 0
  %247 = vmatprep.mubr.bf16.mxu0 0
  %248 = vmatmul.mubr.bf16.gmra.mrb[0].mxu0 %v143
  %v249 = vpop.f32.mrb[0].mxu0
  %v250 = vadd.f32 %v165, %v249
  %v251 = vpop.f32.mrb[0].mxu0
  %v252 = vpop.f32.mrb[0].mxu0
  %v253 = vadd.f32 %v165, %v252
  %v254 = vpop.f32.mrb[0].mxu0
  %255 = vdwg.mxu0
  %256 = vst [vmem:[%s5] sm:$0xff] %v250
  %257 = vst [vmem:[%s5 + $0x8] sm:$0xff] %v253
  // Predicated region
  $region22: #{position_wise_feed_forward.1} parent=0 // pred_check
    _
  $region23: #{position_wise_feed_forward.1} parent=0 // pred_check_branch
    %259 = sbr.rel (0) target = $region25
  $region24: #{position_wise_feed_forward.1} parent=0 // pred_region
    _
  $region25: #{position_wise_feed_forward.1} parent=0 // pred_fallthru
    _
  // Predicated region
  $region26: #{position_wise_feed_forward.1} parent=0 // pred_check
    _
  $region27: #{position_wise_feed_forward.1} parent=0 // pred_check_branch
    %261 = sbr.rel (0) target = $region29
  $region28: #{position_wise_feed_forward.1} parent=0 // pred_region
    _
  $region29: #{position_wise_feed_forward.1} parent=0 // pred_fallthru
    _

</llo_original>
